<compile_context>
chip_gen: v5e
topology: v5e:2x2
jax: 0.10.0
libtpu: 0.0.40
codegen_flags: <defaults>
</compile_context>

<pallas_src>
import functools
import math

import jax
import jax.numpy as jnp
from jax.experimental import pallas as pl
from jax.experimental.pallas import tpu as pltpu


def _round_up(x, m):
    return (x + m - 1) // m * m


def _pick_spatial_tile(HW):
    """Largest multiple-of-128 spatial tile that divides H*W, capped so the
    f32 accumulator stays small and (when possible) there are >=2 tiles."""
    cap = min(1024, HW // 2) if HW >= 256 else HW
    best = 0
    t = 128
    while t <= cap:
        if HW % t == 0:
            best = t
        t += 128
    # TODO(synk): non-divisor H*W (e.g. 56x56) falls back to one masked-store
    # tile; a cdiv grid + edge masking would keep stores lane-dense there.
    return best if best else HW


def _pick_cout_block(Cout):
    """Cout rows per grid step (<=256 keeps the MXU M dimension well fed)."""
    if Cout <= 256:
        return Cout
    for blk in (256, 128):
        if Cout % blk == 0:
            return blk
    return Cout


def _convx_kernel(x_ref, w_ref, o_ref, xpad_ref, *, H, W, KH, KW, THW, lead):
    """Fused conv(stride=1, 'same' pad, no bias) + ReLU for one batch element
    and one block of output channels.

    x_ref    : (1, Cin, H*W)               f32, lane-flattened NCHW image
    w_ref    : (KH*KW, Cout_blk, Cin)      bf16 tap-major weight stack
    o_ref    : (1, Cout_blk, H*W)          f32 output
    xpad_ref : (Cin, lead + H*W + ph*W+pw) bf16 row-padded flattened image
    """
    ph, pw = KH // 2, KW // 2
    HW = H * W
    Cin = x_ref.shape[1]
    cdt = xpad_ref.dtype

    # Build the row-padded, lane-flattened (bf16) image once per batch element.
    # The Cout-block axis is the inner grid axis and is marked "arbitrary", so
    # the scratch carries across it safely.  Only pad lanes are zeroed; the
    # interior copy lands at a 128-aligned lane offset (unmasked stores).
    @pl.when(pl.program_id(1) == 0)
    def _build():
        if lead:
            xpad_ref[:, :lead] = jnp.zeros((Cin, lead), cdt)
        tail = xpad_ref.shape[1] - (lead + HW)
        if tail:
            xpad_ref[:, lead + HW:] = jnp.zeros((Cin, tail), cdt)
        xpad_ref[:, lead:lead + HW] = x_ref[0].astype(cdt)

    # Loop-invariant weight taps: load once per grid step, reuse across tiles.
    w_taps = [w_ref[t] for t in range(KH * KW)]

    for t0 in range(0, HW, THW):                         # static spatial tiles
        tw = min(THW, HW - t0)
        # Absolute column index of every lane in this tile (for the dw masks).
        col = (jax.lax.broadcasted_iota(jnp.int32, (1, tw), 1) + t0) % W
        acc = jnp.zeros((o_ref.shape[1], tw), jnp.float32)
        for kh in range(KH):
            for kw in range(KW):
                dw = kw - pw
                start = lead - (ph * W + pw) + t0 + kh * W + kw
                tap = xpad_ref[:, start:start + tw]      # static lane slice
                if dw < 0:                               # mask column wrap
                    tap = jnp.where(col >= -dw, tap, 0.0)
                elif dw > 0:
                    tap = jnp.where(col < W - dw, tap, 0.0)
                acc = acc + jnp.dot(w_taps[kh * KW + kw], tap,
                                    preferred_element_type=jnp.float32)
        o_ref[0, :, t0:t0 + tw] = jnp.maximum(acc, 0.0).astype(o_ref.dtype)


def convx_forward(x_nchw, weight_oihw):
    """ConvX forward: relu(bn(conv(x))) where bn(activation='none') is identity.

    x_nchw      : (N, Cin, H, W)  float32, PyTorch NCHW layout
    weight_oihw : (Cout, Cin, KH, KW)  conv weight (no bias)
    returns (N, Cout, H, W) float32.
    """
    N, Cin, H, W = x_nchw.shape
    Cout, Cin_w, KH, KW = weight_oihw.shape
    assert Cin == Cin_w
    assert KH % 2 == 1 and KW % 2 == 1, "expect odd kernel ('same' padding)"
    # TODO(synk): stride > 1 variant of ConvX not implemented (module default is 1).

    ph, pw = KH // 2, KW // 2
    HW = H * W
    pad = ph * W + pw                  # halo lanes needed on each side
    lead = _round_up(pad, 128)         # 128-aligned so the interior copy is aligned
    hpw = lead + HW + pad              # scratch lane extent

    compute_dtype = jnp.bfloat16       # MXU operands; accumulation stays f32

    # Tap-major weight stack whose contraction order matches the kernel.
    w_taps = jnp.transpose(weight_oihw, (2, 3, 0, 1)).reshape(
        KH * KW, Cout, Cin).astype(compute_dtype)

    # Metadata-only flatten of the spatial dims onto lanes.
    x_flat = x_nchw.reshape(N, Cin, HW)

    thw = _pick_spatial_tile(HW)
    cout_blk = _pick_cout_block(Cout)
    n_cout = Cout // cout_blk

    kern = functools.partial(_convx_kernel, H=H, W=W, KH=KH, KW=KW,
                             THW=thw, lead=lead)

    flops = 2 * N * HW * Cout * Cin * KH * KW
    bytes_accessed = 4 * x_flat.size + 2 * w_taps.size + 4 * N * Cout * HW

    out_flat = pl.pallas_call(
        kern,
        out_shape=jax.ShapeDtypeStruct((N, Cout, HW), x_nchw.dtype),
        grid=(N, n_cout),
        in_specs=[
            # Full flattened image; block index constant along the Cout axis,
            # so it is DMA'd once per batch element.
            # TODO(synk): for very large images (Cin*H*W*4 >> VMEM budget)
            # switch to a halo'd row-slab manual DMA (memory_space=pl.ANY
            # + pltpu.make_async_copy) so VMEM holds only a slab.
            pl.BlockSpec((1, Cin, HW), lambda b, j: (b, 0, 0)),
            pl.BlockSpec((KH * KW, cout_blk, Cin), lambda b, j: (0, j, 0)),
        ],
        out_specs=pl.BlockSpec((1, cout_blk, HW), lambda b, j: (b, j, 0)),
        scratch_shapes=[pltpu.VMEM((Cin, hpw), compute_dtype)],
        compiler_params=pltpu.CompilerParams(
            dimension_semantics=("parallel", "arbitrary"),
            vmem_limit_bytes=48 * 1024 * 1024),
        cost_estimate=pl.CostEstimate(
            flops=flops, transcendentals=0, bytes_accessed=bytes_accessed),
    )(x_flat, w_taps)

    # Metadata-only reshape back to NCHW spatial layout.
    return out_flat.reshape(N, Cout, H, W)


def init_convx_params(key, in_planes, out_planes, kernel=3):
    """Deterministic synthetic weights in PyTorch OIHW layout (He init)."""
    fan_in = in_planes * kernel * kernel
    std = math.sqrt(2.0 / fan_in)
    w = jax.random.normal(
        key, (out_planes, in_planes, kernel, kernel), jnp.float32) * std
    return {"weight": w}


def _reference_forward(x_nchw, weight_oihw):
    """Pure-JAX reference (lax.conv) with inputs pre-rounded to bf16 to match
    the kernel's MXU operand precision (both accumulate in f32)."""
    xq = x_nchw.astype(jnp.bfloat16).astype(jnp.float32)
    wq = weight_oihw.astype(jnp.bfloat16).astype(jnp.float32)
    ph = weight_oihw.shape[2] // 2
    pw = weight_oihw.shape[3] // 2
    y = jax.lax.conv_general_dilated(
        xq, wq, window_strides=(1, 1),
        padding=[(ph, ph), (pw, pw)],
        dimension_numbers=("NCHW", "OIHW", "NCHW"))
    return jnp.maximum(y, 0.0)


if __name__ == "__main__":
    # Small shapes consistent with the module: N=2, in_planes=4, out_planes=8,
    # kernel=3, stride=1 (defaults), spatial 16x16.
    key = jax.random.PRNGKey(0)
    kx, kw = jax.random.split(key)

    N, C_IN, C_OUT, H, W = 2, 4, 8, 16, 16
    x = jax.random.normal(kx, (N, C_IN, H, W), jnp.float32)
    params = init_convx_params(kw, C_IN, C_OUT, kernel=3)

    out = jax.block_until_ready(convx_forward(x, params["weight"]))
    assert out.shape == (N, C_OUT, H, W), out.shape

    ref = jax.block_until_ready(_reference_forward(x, params["weight"]))
    if not bool(jnp.allclose(out, ref, atol=2e-3, rtol=2e-3)):
        max_err = float(jnp.max(jnp.abs(out - ref)))
        raise AssertionError(
            f"Pallas ConvX kernel mismatch vs JAX reference (max abs err {max_err})")

    print("KERNEL_OK")
</pallas_src>

<mosaic_0001>
module attributes {stable_mosaic.version = 11 : i64} {
  func.func @_convx_kernel(%arg0: i32, %arg1: i32, %arg2: memref<1x4x256xf32, #tpu.memory_space<vmem>>, %arg3: memref<9x8x4xbf16, #tpu.memory_space<vmem>>, %arg4: memref<1x8x256xf32, #tpu.memory_space<vmem>>, %arg5: memref<4x401xbf16, #tpu.memory_space<vmem>>) attributes {dimension_semantics = [#tpu.dimension_semantics<parallel>, #tpu.dimension_semantics<arbitrary>], iteration_bounds = array<i64: 2, 1>, scalar_prefetch = 0 : i64, scratch_operands = 1 : i64, tpu.core_type = #tpu.core_type<tc>, window_params = [{transform_indices = @transform_0, window_bounds = array<i64: 1, 4, 256>}, {transform_indices = @transform_1, window_bounds = array<i64: 9, 8, 4>}, {transform_indices = @transform_2, window_bounds = array<i64: 1, 8, 256>}]} {
    %c0_i32 = arith.constant 0 : i32
    %0 = arith.cmpi eq, %arg1, %c0_i32 : i32
    %1 = arith.extui %0 : i1 to i32
    %c0_i32_0 = arith.constant 0 : i32
    %2 = arith.cmpi ne, %1, %c0_i32_0 : i32
    scf.if %2 {
      %cst_98 = arith.constant 0.000000e+00 : bf16
      %209 = vector.broadcast %cst_98 : bf16 to vector<4x128xbf16>
      %c0_99 = arith.constant 0 : index
      %c0_100 = arith.constant 0 : index
      %210 = vector.load %arg5[%c0_99, %c0_100] : memref<4x401xbf16, #tpu.memory_space<vmem>>, vector<4x128xbf16>
      tpu.vector_store %arg5[%c0_99, %c0_100], %209 {strides = array<i32>} : memref<4x401xbf16, #tpu.memory_space<vmem>>, vector<4x128xbf16>,
      %cst_101 = arith.constant 0.000000e+00 : bf16
      %211 = vector.broadcast %cst_101 : bf16 to vector<4x17xbf16>
      %c0_102 = arith.constant 0 : index
      %c384 = arith.constant 384 : index
      %212 = vector.load %arg5[%c0_102, %c384] : memref<4x401xbf16, #tpu.memory_space<vmem>>, vector<4x17xbf16>
      tpu.vector_store %arg5[%c0_102, %c384], %211 {strides = array<i32>} : memref<4x401xbf16, #tpu.memory_space<vmem>>, vector<4x17xbf16>,
      %c0_103 = arith.constant 0 : index
      %c0_104 = arith.constant 0 : index
      %c0_105 = arith.constant 0 : index
      %213 = vector.load %arg2[%c0_103, %c0_104, %c0_105] : memref<1x4x256xf32, #tpu.memory_space<vmem>>, vector<1x4x256xf32>
      %214 = vector.shape_cast %213 : vector<1x4x256xf32> to vector<4x256xf32>
      %215 = arith.truncf %214 : vector<4x256xf32> to vector<4x256xbf16>
      %c0_106 = arith.constant 0 : index
      %c128_107 = arith.constant 128 : index
      %216 = vector.load %arg5[%c0_106, %c128_107] : memref<4x401xbf16, #tpu.memory_space<vmem>>, vector<4x256xbf16>
      tpu.vector_store %arg5[%c0_106, %c128_107], %215 {strides = array<i32>} : memref<4x401xbf16, #tpu.memory_space<vmem>>, vector<4x256xbf16>,
    } else {
    }
    %c0 = arith.constant 0 : index
    %c0_1 = arith.constant 0 : index
    %c0_2 = arith.constant 0 : index
    %3 = vector.load %arg3[%c0, %c0_1, %c0_2] : memref<9x8x4xbf16, #tpu.memory_space<vmem>>, vector<1x8x4xbf16>
    %4 = vector.shape_cast %3 : vector<1x8x4xbf16> to vector<8x4xbf16>
    %c1 = arith.constant 1 : index
    %c0_3 = arith.constant 0 : index
    %c0_4 = arith.constant 0 : index
    %5 = vector.load %arg3[%c1, %c0_3, %c0_4] : memref<9x8x4xbf16, #tpu.memory_space<vmem>>, vector<1x8x4xbf16>
    %6 = vector.shape_cast %5 : vector<1x8x4xbf16> to vector<8x4xbf16>
    %c2 = arith.constant 2 : index
    %c0_5 = arith.constant 0 : index
    %c0_6 = arith.constant 0 : index
    %7 = vector.load %arg3[%c2, %c0_5, %c0_6] : memref<9x8x4xbf16, #tpu.memory_space<vmem>>, vector<1x8x4xbf16>
    %8 = vector.shape_cast %7 : vector<1x8x4xbf16> to vector<8x4xbf16>
    %c3 = arith.constant 3 : index
    %c0_7 = arith.constant 0 : index
    %c0_8 = arith.constant 0 : index
    %9 = vector.load %arg3[%c3, %c0_7, %c0_8] : memref<9x8x4xbf16, #tpu.memory_space<vmem>>, vector<1x8x4xbf16>
    %10 = vector.shape_cast %9 : vector<1x8x4xbf16> to vector<8x4xbf16>
    %c4 = arith.constant 4 : index
    %c0_9 = arith.constant 0 : index
    %c0_10 = arith.constant 0 : index
    %11 = vector.load %arg3[%c4, %c0_9, %c0_10] : memref<9x8x4xbf16, #tpu.memory_space<vmem>>, vector<1x8x4xbf16>
    %12 = vector.shape_cast %11 : vector<1x8x4xbf16> to vector<8x4xbf16>
    %c5 = arith.constant 5 : index
    %c0_11 = arith.constant 0 : index
    %c0_12 = arith.constant 0 : index
    %13 = vector.load %arg3[%c5, %c0_11, %c0_12] : memref<9x8x4xbf16, #tpu.memory_space<vmem>>, vector<1x8x4xbf16>
    %14 = vector.shape_cast %13 : vector<1x8x4xbf16> to vector<8x4xbf16>
    %c6 = arith.constant 6 : index
    %c0_13 = arith.constant 0 : index
    %c0_14 = arith.constant 0 : index
    %15 = vector.load %arg3[%c6, %c0_13, %c0_14] : memref<9x8x4xbf16, #tpu.memory_space<vmem>>, vector<1x8x4xbf16>
    %16 = vector.shape_cast %15 : vector<1x8x4xbf16> to vector<8x4xbf16>
    %c7 = arith.constant 7 : index
    %c0_15 = arith.constant 0 : index
    %c0_16 = arith.constant 0 : index
    %17 = vector.load %arg3[%c7, %c0_15, %c0_16] : memref<9x8x4xbf16, #tpu.memory_space<vmem>>, vector<1x8x4xbf16>
    %18 = vector.shape_cast %17 : vector<1x8x4xbf16> to vector<8x4xbf16>
    %c8 = arith.constant 8 : index
    %c0_17 = arith.constant 0 : index
    %c0_18 = arith.constant 0 : index
    %19 = vector.load %arg3[%c8, %c0_17, %c0_18] : memref<9x8x4xbf16, #tpu.memory_space<vmem>>, vector<1x8x4xbf16>
    %20 = vector.shape_cast %19 : vector<1x8x4xbf16> to vector<8x4xbf16>
    %21 = tpu.iota {dimensions = array<i32: 1>} : vector<1x128xi32>
    %c0_i32_19 = arith.constant 0 : i32
    %22 = vector.broadcast %c0_i32_19 : i32 to vector<1x128xi32>
    %23 = arith.addi %21, %22 : vector<1x128xi32>
    %c16_i32 = arith.constant 16 : i32
    %c0_i32_20 = arith.constant 0 : i32
    %24 = arith.cmpi eq, %c16_i32, %c0_i32_20 : i32
    %c1_i32 = arith.constant 1 : i32
    %25 = arith.select %24, %c1_i32, %c16_i32 : i32
    %26 = vector.broadcast %25 : i32 to vector<1x128xi32>
    %27 = arith.remsi %23, %26 : vector<1x128xi32>
    %c0_i32_21 = arith.constant 0 : i32
    %28 = vector.broadcast %c0_i32_21 : i32 to vector<1x128xi32>
    %29 = arith.cmpi ne, %27, %28 : vector<1x128xi32>
    %c0_i32_22 = arith.constant 0 : i32
    %30 = vector.broadcast %c0_i32_22 : i32 to vector<1x128xi32>
    %31 = arith.cmpi slt, %27, %30 : vector<1x128xi32>
    %c0_i32_23 = arith.constant 0 : i32
    %32 = arith.cmpi slt, %25, %c0_i32_23 : i32
    %33 = vector.broadcast %32 : i1 to vector<1x128xi1>
    %34 = vector.broadcast %33 : vector<1x128xi1> to vector<1x128xi1>
    %35 = arith.xori %31, %34 : vector<1x128xi1>
    %36 = arith.andi %35, %29 : vector<1x128xi1>
    %37 = vector.broadcast %25 : i32 to vector<1x128xi32>
    %38 = arith.addi %27, %37 : vector<1x128xi32>
    %39 = arith.select %36, %38, %27 : vector<1x128xi1>, vector<1x128xi32>
    %cst = arith.constant 0.000000e+00 : f32
    %40 = vector.broadcast %cst : f32 to vector<8x128xf32>
    %c0_24 = arith.constant 0 : index
    %c111 = arith.constant 111 : index
    %41 = vector.load %arg5[%c0_24, %c111] : memref<4x401xbf16, #tpu.memory_space<vmem>>, vector<4x128xbf16>
    %c1_i32_25 = arith.constant 1 : i32
    %42 = vector.broadcast %c1_i32_25 : i32 to vector<1x128xi32>
    %43 = arith.cmpi sge, %39, %42 : vector<1x128xi32>
    %cst_26 = arith.constant 0.000000e+00 : f32
    %44 = arith.truncf %cst_26 : f32 to bf16
    %45 = vector.shape_cast %43 : vector<1x128xi1> to vector<1x128xi1>
    %46 = vector.broadcast %45 : vector<1x128xi1> to vector<4x128xi1>
    %47 = vector.broadcast %44 : bf16 to vector<4x128xbf16>
    %48 = arith.select %46, %41, %47 : vector<4x128xi1>, vector<4x128xbf16>
    %cst_27 = arith.constant dense<0.000000e+00> : vector<8x128xf32>
    %49 = tpu.matmul %4, %48, %cst_27 {dimension_numbers = #tpu.dot_dimension_numbers<[1], [0], [0], [1], [0, 0, 1, 1], [], []>} : vector<8x4xbf16>, vector<4x128xbf16>, vector<8x128xf32> -> vector<8x128xf32>
    %50 = arith.addf %40, %49 : vector<8x128xf32>
    %c0_28 = arith.constant 0 : index
    %c112 = arith.constant 112 : index
    %51 = vector.load %arg5[%c0_28, %c112] : memref<4x401xbf16, #tpu.memory_space<vmem>>, vector<4x128xbf16>
    %cst_29 = arith.constant dense<0.000000e+00> : vector<8x128xf32>
    %52 = tpu.matmul %6, %51, %cst_29 {dimension_numbers = #tpu.dot_dimension_numbers<[1], [0], [0], [1], [0, 0, 1, 1], [], []>} : vector<8x4xbf16>, vector<4x128xbf16>, vector<8x128xf32> -> vector<8x128xf32>
    %53 = arith.addf %50, %52 : vector<8x128xf32>
    %c0_30 = arith.constant 0 : index
    %c113 = arith.constant 113 : index
    %54 = vector.load %arg5[%c0_30, %c113] : memref<4x401xbf16, #tpu.memory_space<vmem>>, vector<4x128xbf16>
    %c15_i32 = arith.constant 15 : i32
    %55 = vector.broadcast %c15_i32 : i32 to vector<1x128xi32>
    %56 = arith.cmpi slt, %39, %55 : vector<1x128xi32>
    %cst_31 = arith.constant 0.000000e+00 : f32
    %57 = arith.truncf %cst_31 : f32 to bf16
    %58 = vector.shape_cast %56 : vector<1x128xi1> to vector<1x128xi1>
    %59 = vector.broadcast %58 : vector<1x128xi1> to vector<4x128xi1>
    %60 = vector.broadcast %57 : bf16 to vector<4x128xbf16>
    %61 = arith.select %59, %54, %60 : vector<4x128xi1>, vector<4x128xbf16>
    %cst_32 = arith.constant dense<0.000000e+00> : vector<8x128xf32>
    %62 = tpu.matmul %8, %61, %cst_32 {dimension_numbers = #tpu.dot_dimension_numbers<[1], [0], [0], [1], [0, 0, 1, 1], [], []>} : vector<8x4xbf16>, vector<4x128xbf16>, vector<8x128xf32> -> vector<8x128xf32>
    %63 = arith.addf %53, %62 : vector<8x128xf32>
    %c0_33 = arith.constant 0 : index
    %c127 = arith.constant 127 : index
    %64 = vector.load %arg5[%c0_33, %c127] : memref<4x401xbf16, #tpu.memory_space<vmem>>, vector<4x128xbf16>
    %c1_i32_34 = arith.constant 1 : i32
    %65 = vector.broadcast %c1_i32_34 : i32 to vector<1x128xi32>
    %66 = arith.cmpi sge, %39, %65 : vector<1x128xi32>
    %cst_35 = arith.constant 0.000000e+00 : f32
    %67 = arith.truncf %cst_35 : f32 to bf16
    %68 = vector.shape_cast %66 : vector<1x128xi1> to vector<1x128xi1>
    %69 = vector.broadcast %68 : vector<1x128xi1> to vector<4x128xi1>
    %70 = vector.broadcast %67 : bf16 to vector<4x128xbf16>
    %71 = arith.select %69, %64, %70 : vector<4x128xi1>, vector<4x128xbf16>
    %cst_36 = arith.constant dense<0.000000e+00> : vector<8x128xf32>
    %72 = tpu.matmul %10, %71, %cst_36 {dimension_numbers = #tpu.dot_dimension_numbers<[1], [0], [0], [1], [0, 0, 1, 1], [], []>} : vector<8x4xbf16>, vector<4x128xbf16>, vector<8x128xf32> -> vector<8x128xf32>
    %73 = arith.addf %63, %72 : vector<8x128xf32>
    %c0_37 = arith.constant 0 : index
    %c128 = arith.constant 128 : index
    %74 = vector.load %arg5[%c0_37, %c128] : memref<4x401xbf16, #tpu.memory_space<vmem>>, vector<4x128xbf16>
    %cst_38 = arith.constant dense<0.000000e+00> : vector<8x128xf32>
    %75 = tpu.matmul %12, %74, %cst_38 {dimension_numbers = #tpu.dot_dimension_numbers<[1], [0], [0], [1], [0, 0, 1, 1], [], []>} : vector<8x4xbf16>, vector<4x128xbf16>, vector<8x128xf32> -> vector<8x128xf32>
    %76 = arith.addf %73, %75 : vector<8x128xf32>
    %c0_39 = arith.constant 0 : index
    %c129 = arith.constant 129 : index
    %77 = vector.load %arg5[%c0_39, %c129] : memref<4x401xbf16, #tpu.memory_space<vmem>>, vector<4x128xbf16>
    %c15_i32_40 = arith.constant 15 : i32
    %78 = vector.broadcast %c15_i32_40 : i32 to vector<1x128xi32>
    %79 = arith.cmpi slt, %39, %78 : vector<1x128xi32>
    %cst_41 = arith.constant 0.000000e+00 : f32
    %80 = arith.truncf %cst_41 : f32 to bf16
    %81 = vector.shape_cast %79 : vector<1x128xi1> to vector<1x128xi1>
    %82 = vector.broadcast %81 : vector<1x128xi1> to vector<4x128xi1>
    %83 = vector.broadcast %80 : bf16 to vector<4x128xbf16>
    %84 = arith.select %82, %77, %83 : vector<4x128xi1>, vector<4x128xbf16>
    %cst_42 = arith.constant dense<0.000000e+00> : vector<8x128xf32>
    %85 = tpu.matmul %14, %84, %cst_42 {dimension_numbers = #tpu.dot_dimension_numbers<[1], [0], [0], [1], [0, 0, 1, 1], [], []>} : vector<8x4xbf16>, vector<4x128xbf16>, vector<8x128xf32> -> vector<8x128xf32>
    %86 = arith.addf %76, %85 : vector<8x128xf32>
    %c0_43 = arith.constant 0 : index
    %c143 = arith.constant 143 : index
    %87 = vector.load %arg5[%c0_43, %c143] : memref<4x401xbf16, #tpu.memory_space<vmem>>, vector<4x128xbf16>
    %c1_i32_44 = arith.constant 1 : i32
    %88 = vector.broadcast %c1_i32_44 : i32 to vector<1x128xi32>
    %89 = arith.cmpi sge, %39, %88 : vector<1x128xi32>
    %cst_45 = arith.constant 0.000000e+00 : f32
    %90 = arith.truncf %cst_45 : f32 to bf16
    %91 = vector.shape_cast %89 : vector<1x128xi1> to vector<1x128xi1>
    %92 = vector.broadcast %91 : vector<1x128xi1> to vector<4x128xi1>
    %93 = vector.broadcast %90 : bf16 to vector<4x128xbf16>
    %94 = arith.select %92, %87, %93 : vector<4x128xi1>, vector<4x128xbf16>
    %cst_46 = arith.constant dense<0.000000e+00> : vector<8x128xf32>
    %95 = tpu.matmul %16, %94, %cst_46 {dimension_numbers = #tpu.dot_dimension_numbers<[1], [0], [0], [1], [0, 0, 1, 1], [], []>} : vector<8x4xbf16>, vector<4x128xbf16>, vector<8x128xf32> -> vector<8x128xf32>
    %96 = arith.addf %86, %95 : vector<8x128xf32>
    %c0_47 = arith.constant 0 : index
    %c144 = arith.constant 144 : index
    %97 = vector.load %arg5[%c0_47, %c144] : memref<4x401xbf16, #tpu.memory_space<vmem>>, vector<4x128xbf16>
    %cst_48 = arith.constant dense<0.000000e+00> : vector<8x128xf32>
    %98 = tpu.matmul %18, %97, %cst_48 {dimension_numbers = #tpu.dot_dimension_numbers<[1], [0], [0], [1], [0, 0, 1, 1], [], []>} : vector<8x4xbf16>, vector<4x128xbf16>, vector<8x128xf32> -> vector<8x128xf32>
    %99 = arith.addf %96, %98 : vector<8x128xf32>
    %c0_49 = arith.constant 0 : index
    %c145 = arith.constant 145 : index
    %100 = vector.load %arg5[%c0_49, %c145] : memref<4x401xbf16, #tpu.memory_space<vmem>>, vector<4x128xbf16>
    %c15_i32_50 = arith.constant 15 : i32
    %101 = vector.broadcast %c15_i32_50 : i32 to vector<1x128xi32>
    %102 = arith.cmpi slt, %39, %101 : vector<1x128xi32>
    %cst_51 = arith.constant 0.000000e+00 : f32
    %103 = arith.truncf %cst_51 : f32 to bf16
    %104 = vector.shape_cast %102 : vector<1x128xi1> to vector<1x128xi1>
    %105 = vector.broadcast %104 : vector<1x128xi1> to vector<4x128xi1>
    %106 = vector.broadcast %103 : bf16 to vector<4x128xbf16>
    %107 = arith.select %105, %100, %106 : vector<4x128xi1>, vector<4x128xbf16>
    %cst_52 = arith.constant dense<0.000000e+00> : vector<8x128xf32>
    %108 = tpu.matmul %20, %107, %cst_52 {dimension_numbers = #tpu.dot_dimension_numbers<[1], [0], [0], [1], [0, 0, 1, 1], [], []>} : vector<8x4xbf16>, vector<4x128xbf16>, vector<8x128xf32> -> vector<8x128xf32>
    %109 = arith.addf %99, %108 : vector<8x128xf32>
    %cst_53 = arith.constant 0.000000e+00 : f32
    %110 = vector.broadcast %cst_53 : f32 to vector<8x128xf32>
    %111 = arith.maximumf %109, %110 : vector<8x128xf32>
    %c0_54 = arith.constant 0 : index
    %c0_55 = arith.constant 0 : index
    %c0_56 = arith.constant 0 : index
    %112 = vector.load %arg4[%c0_54, %c0_55, %c0_56] : memref<1x8x256xf32, #tpu.memory_space<vmem>>, vector<1x8x128xf32>
    %113 = vector.shape_cast %112 : vector<1x8x128xf32> to vector<8x128xf32>
    %114 = vector.shape_cast %111 : vector<8x128xf32> to vector<1x8x128xf32>
    tpu.vector_store %arg4[%c0_54, %c0_55, %c0_56], %114 {strides = array<i32>} : memref<1x8x256xf32, #tpu.memory_space<vmem>>, vector<1x8x128xf32>,
    %115 = tpu.iota {dimensions = array<i32: 1>} : vector<1x128xi32>
    %c128_i32 = arith.constant 128 : i32
    %116 = vector.broadcast %c128_i32 : i32 to vector<1x128xi32>
    %117 = arith.addi %115, %116 : vector<1x128xi32>
    %c16_i32_57 = arith.constant 16 : i32
    %c0_i32_58 = arith.constant 0 : i32
    %118 = arith.cmpi eq, %c16_i32_57, %c0_i32_58 : i32
    %c1_i32_59 = arith.constant 1 : i32
    %119 = arith.select %118, %c1_i32_59, %c16_i32_57 : i32
    %120 = vector.broadcast %119 : i32 to vector<1x128xi32>
    %121 = arith.remsi %117, %120 : vector<1x128xi32>
    %c0_i32_60 = arith.constant 0 : i32
    %122 = vector.broadcast %c0_i32_60 : i32 to vector<1x128xi32>
    %123 = arith.cmpi ne, %121, %122 : vector<1x128xi32>
    %c0_i32_61 = arith.constant 0 : i32
    %124 = vector.broadcast %c0_i32_61 : i32 to vector<1x128xi32>
    %125 = arith.cmpi slt, %121, %124 : vector<1x128xi32>
    %c0_i32_62 = arith.constant 0 : i32
    %126 = arith.cmpi slt, %119, %c0_i32_62 : i32
    %127 = vector.broadcast %126 : i1 to vector<1x128xi1>
    %128 = vector.broadcast %127 : vector<1x128xi1> to vector<1x128xi1>
    %129 = arith.xori %125, %128 : vector<1x128xi1>
    %130 = arith.andi %129, %123 : vector<1x128xi1>
    %131 = vector.broadcast %119 : i32 to vector<1x128xi32>
    %132 = arith.addi %121, %131 : vector<1x128xi32>
    %133 = arith.select %130, %132, %121 : vector<1x128xi1>, vector<1x128xi32>
    %cst_63 = arith.constant 0.000000e+00 : f32
    %134 = vector.broadcast %cst_63 : f32 to vector<8x128xf32>
    %c0_64 = arith.constant 0 : index
    %c239 = arith.constant 239 : index
    %135 = vector.load %arg5[%c0_64, %c239] : memref<4x401xbf16, #tpu.memory_space<vmem>>, vector<4x128xbf16>
    %c1_i32_65 = arith.constant 1 : i32
    %136 = vector.broadcast %c1_i32_65 : i32 to vector<1x128xi32>
    %137 = arith.cmpi sge, %133, %136 : vector<1x128xi32>
    %cst_66 = arith.constant 0.000000e+00 : f32
    %138 = arith.truncf %cst_66 : f32 to bf16
    %139 = vector.shape_cast %137 : vector<1x128xi1> to vector<1x128xi1>
    %140 = vector.broadcast %139 : vector<1x128xi1> to vector<4x128xi1>
    %141 = vector.broadcast %138 : bf16 to vector<4x128xbf16>
    %142 = arith.select %140, %135, %141 : vector<4x128xi1>, vector<4x128xbf16>
    %cst_67 = arith.constant dense<0.000000e+00> : vector<8x128xf32>
    %143 = tpu.matmul %4, %142, %cst_67 {dimension_numbers = #tpu.dot_dimension_numbers<[1], [0], [0], [1], [0, 0, 1, 1], [], []>} : vector<8x4xbf16>, vector<4x128xbf16>, vector<8x128xf32> -> vector<8x128xf32>
    %144 = arith.addf %134, %143 : vector<8x128xf32>
    %c0_68 = arith.constant 0 : index
    %c240 = arith.constant 240 : index
    %145 = vector.load %arg5[%c0_68, %c240] : memref<4x401xbf16, #tpu.memory_space<vmem>>, vector<4x128xbf16>
    %cst_69 = arith.constant dense<0.000000e+00> : vector<8x128xf32>
    %146 = tpu.matmul %6, %145, %cst_69 {dimension_numbers = #tpu.dot_dimension_numbers<[1], [0], [0], [1], [0, 0, 1, 1], [], []>} : vector<8x4xbf16>, vector<4x128xbf16>, vector<8x128xf32> -> vector<8x128xf32>
    %147 = arith.addf %144, %146 : vector<8x128xf32>
    %c0_70 = arith.constant 0 : index
    %c241 = arith.constant 241 : index
    %148 = vector.load %arg5[%c0_70, %c241] : memref<4x401xbf16, #tpu.memory_space<vmem>>, vector<4x128xbf16>
    %c15_i32_71 = arith.constant 15 : i32
    %149 = vector.broadcast %c15_i32_71 : i32 to vector<1x128xi32>
    %150 = arith.cmpi slt, %133, %149 : vector<1x128xi32>
    %cst_72 = arith.constant 0.000000e+00 : f32
    %151 = arith.truncf %cst_72 : f32 to bf16
    %152 = vector.shape_cast %150 : vector<1x128xi1> to vector<1x128xi1>
    %153 = vector.broadcast %152 : vector<1x128xi1> to vector<4x128xi1>
    %154 = vector.broadcast %151 : bf16 to vector<4x128xbf16>
    %155 = arith.select %153, %148, %154 : vector<4x128xi1>, vector<4x128xbf16>
    %cst_73 = arith.constant dense<0.000000e+00> : vector<8x128xf32>
    %156 = tpu.matmul %8, %155, %cst_73 {dimension_numbers = #tpu.dot_dimension_numbers<[1], [0], [0], [1], [0, 0, 1, 1], [], []>} : vector<8x4xbf16>, vector<4x128xbf16>, vector<8x128xf32> -> vector<8x128xf32>
    %157 = arith.addf %147, %156 : vector<8x128xf32>
    %c0_74 = arith.constant 0 : index
    %c255 = arith.constant 255 : index
    %158 = vector.load %arg5[%c0_74, %c255] : memref<4x401xbf16, #tpu.memory_space<vmem>>, vector<4x128xbf16>
    %c1_i32_75 = arith.constant 1 : i32
    %159 = vector.broadcast %c1_i32_75 : i32 to vector<1x128xi32>
    %160 = arith.cmpi sge, %133, %159 : vector<1x128xi32>
    %cst_76 = arith.constant 0.000000e+00 : f32
    %161 = arith.truncf %cst_76 : f32 to bf16
    %162 = vector.shape_cast %160 : vector<1x128xi1> to vector<1x128xi1>
    %163 = vector.broadcast %162 : vector<1x128xi1> to vector<4x128xi1>
    %164 = vector.broadcast %161 : bf16 to vector<4x128xbf16>
    %165 = arith.select %163, %158, %164 : vector<4x128xi1>, vector<4x128xbf16>
    %cst_77 = arith.constant dense<0.000000e+00> : vector<8x128xf32>
    %166 = tpu.matmul %10, %165, %cst_77 {dimension_numbers = #tpu.dot_dimension_numbers<[1], [0], [0], [1], [0, 0, 1, 1], [], []>} : vector<8x4xbf16>, vector<4x128xbf16>, vector<8x128xf32> -> vector<8x128xf32>
    %167 = arith.addf %157, %166 : vector<8x128xf32>
    %c0_78 = arith.constant 0 : index
    %c256 = arith.constant 256 : index
    %168 = vector.load %arg5[%c0_78, %c256] : memref<4x401xbf16, #tpu.memory_space<vmem>>, vector<4x128xbf16>
    %cst_79 = arith.constant dense<0.000000e+00> : vector<8x128xf32>
    %169 = tpu.matmul %12, %168, %cst_79 {dimension_numbers = #tpu.dot_dimension_numbers<[1], [0], [0], [1], [0, 0, 1, 1], [], []>} : vector<8x4xbf16>, vector<4x128xbf16>, vector<8x128xf32> -> vector<8x128xf32>
    %170 = arith.addf %167, %169 : vector<8x128xf32>
    %c0_80 = arith.constant 0 : index
    %c257 = arith.constant 257 : index
    %171 = vector.load %arg5[%c0_80, %c257] : memref<4x401xbf16, #tpu.memory_space<vmem>>, vector<4x128xbf16>
    %c15_i32_81 = arith.constant 15 : i32
    %172 = vector.broadcast %c15_i32_81 : i32 to vector<1x128xi32>
    %173 = arith.cmpi slt, %133, %172 : vector<1x128xi32>
    %cst_82 = arith.constant 0.000000e+00 : f32
    %174 = arith.truncf %cst_82 : f32 to bf16
    %175 = vector.shape_cast %173 : vector<1x128xi1> to vector<1x128xi1>
    %176 = vector.broadcast %175 : vector<1x128xi1> to vector<4x128xi1>
    %177 = vector.broadcast %174 : bf16 to vector<4x128xbf16>
    %178 = arith.select %176, %171, %177 : vector<4x128xi1>, vector<4x128xbf16>
    %cst_83 = arith.constant dense<0.000000e+00> : vector<8x128xf32>
    %179 = tpu.matmul %14, %178, %cst_83 {dimension_numbers = #tpu.dot_dimension_numbers<[1], [0], [0], [1], [0, 0, 1, 1], [], []>} : vector<8x4xbf16>, vector<4x128xbf16>, vector<8x128xf32> -> vector<8x128xf32>
    %180 = arith.addf %170, %179 : vector<8x128xf32>
    %c0_84 = arith.constant 0 : index
    %c271 = arith.constant 271 : index
    %181 = vector.load %arg5[%c0_84, %c271] : memref<4x401xbf16, #tpu.memory_space<vmem>>, vector<4x128xbf16>
    %c1_i32_85 = arith.constant 1 : i32
    %182 = vector.broadcast %c1_i32_85 : i32 to vector<1x128xi32>
    %183 = arith.cmpi sge, %133, %182 : vector<1x128xi32>
    %cst_86 = arith.constant 0.000000e+00 : f32
    %184 = arith.truncf %cst_86 : f32 to bf16
    %185 = vector.shape_cast %183 : vector<1x128xi1> to vector<1x128xi1>
    %186 = vector.broadcast %185 : vector<1x128xi1> to vector<4x128xi1>
    %187 = vector.broadcast %184 : bf16 to vector<4x128xbf16>
    %188 = arith.select %186, %181, %187 : vector<4x128xi1>, vector<4x128xbf16>
    %cst_87 = arith.constant dense<0.000000e+00> : vector<8x128xf32>
    %189 = tpu.matmul %16, %188, %cst_87 {dimension_numbers = #tpu.dot_dimension_numbers<[1], [0], [0], [1], [0, 0, 1, 1], [], []>} : vector<8x4xbf16>, vector<4x128xbf16>, vector<8x128xf32> -> vector<8x128xf32>
    %190 = arith.addf %180, %189 : vector<8x128xf32>
    %c0_88 = arith.constant 0 : index
    %c272 = arith.constant 272 : index
    %191 = vector.load %arg5[%c0_88, %c272] : memref<4x401xbf16, #tpu.memory_space<vmem>>, vector<4x128xbf16>
    %cst_89 = arith.constant dense<0.000000e+00> : vector<8x128xf32>
    %192 = tpu.matmul %18, %191, %cst_89 {dimension_numbers = #tpu.dot_dimension_numbers<[1], [0], [0], [1], [0, 0, 1, 1], [], []>} : vector<8x4xbf16>, vector<4x128xbf16>, vector<8x128xf32> -> vector<8x128xf32>
    %193 = arith.addf %190, %192 : vector<8x128xf32>
    %c0_90 = arith.constant 0 : index
    %c273 = arith.constant 273 : index
    %194 = vector.load %arg5[%c0_90, %c273] : memref<4x401xbf16, #tpu.memory_space<vmem>>, vector<4x128xbf16>
    %c15_i32_91 = arith.constant 15 : i32
    %195 = vector.broadcast %c15_i32_91 : i32 to vector<1x128xi32>
    %196 = arith.cmpi slt, %133, %195 : vector<1x128xi32>
    %cst_92 = arith.constant 0.000000e+00 : f32
    %197 = arith.truncf %cst_92 : f32 to bf16
    %198 = vector.shape_cast %196 : vector<1x128xi1> to vector<1x128xi1>
    %199 = vector.broadcast %198 : vector<1x128xi1> to vector<4x128xi1>
    %200 = vector.broadcast %197 : bf16 to vector<4x128xbf16>
    %201 = arith.select %199, %194, %200 : vector<4x128xi1>, vector<4x128xbf16>
    %cst_93 = arith.constant dense<0.000000e+00> : vector<8x128xf32>
    %202 = tpu.matmul %20, %201, %cst_93 {dimension_numbers = #tpu.dot_dimension_numbers<[1], [0], [0], [1], [0, 0, 1, 1], [], []>} : vector<8x4xbf16>, vector<4x128xbf16>, vector<8x128xf32> -> vector<8x128xf32>
    %203 = arith.addf %193, %202 : vector<8x128xf32>
    %cst_94 = arith.constant 0.000000e+00 : f32
    %204 = vector.broadcast %cst_94 : f32 to vector<8x128xf32>
    %205 = arith.maximumf %203, %204 : vector<8x128xf32>
    %c0_95 = arith.constant 0 : index
    %c0_96 = arith.constant 0 : index
    %c128_97 = arith.constant 128 : index
    %206 = vector.load %arg4[%c0_95, %c0_96, %c128_97] : memref<1x8x256xf32, #tpu.memory_space<vmem>>, vector<1x8x128xf32>
    %207 = vector.shape_cast %206 : vector<1x8x128xf32> to vector<8x128xf32>
    %208 = vector.shape_cast %205 : vector<8x128xf32> to vector<1x8x128xf32>
    tpu.vector_store %arg4[%c0_95, %c0_96, %c128_97], %208 {strides = array<i32>} : memref<1x8x256xf32, #tpu.memory_space<vmem>>, vector<1x8x128xf32>,
    return
  }
  func.func @transform_0(%arg0: i32, %arg1: i32) -> (i32, i32, i32) {
    %c0_i32 = arith.constant 0 : i32
    %c0_i32_0 = arith.constant 0 : i32
    %c0_i32_1 = arith.constant 0 : i32
    return %arg0, %c0_i32, %c0_i32_0 : i32, i32, i32
  }
  func.func @transform_1(%arg0: i32, %arg1: i32) -> (i32, i32, i32) {
    %c0_i32 = arith.constant 0 : i32
    %c0_i32_0 = arith.constant 0 : i32
    %c0_i32_1 = arith.constant 0 : i32
    return %c0_i32, %arg1, %c0_i32_0 : i32, i32, i32
  }
  func.func @transform_2(%arg0: i32, %arg1: i32) -> (i32, i32, i32) {
    %c0_i32 = arith.constant 0 : i32
    %c0_i32_0 = arith.constant 0 : i32
    return %arg0, %arg1, %c0_i32 : i32, i32, i32
  }
}

</mosaic_0001>

<llo_original>
// kernel: tpu_custom_call.1
$region0: #{tpu_custom_call.1}
  #allocation0 [shape = 'u32[]', space=smem, size = 0x4, offset = 0x4, fixed_abs, tag = 'smem constant byte address 0x4 - core index']
  #allocation1 [shape = 'u32[72,128]{1,0:T(1,128)}', space=vmem, size = 0x9000, scoped, tag = 'internal scratch']
  #allocation2 [shape = 'bf16[4,401]{1,0:T(4,128)(2,1)}', space=vmem, size = 0x1000, scoped, tag = 'scratch operand']
  %s0 = inlined_call_operand.vmem [shape: f32[2,4,256], index: 0, kind: input, shape index: {}]
  %s1 = inlined_call_operand.vmem [shape: bf16[9,8,4], index: 1, kind: input, shape index: {}]
  %s2 = inlined_call_operand.hbm [shape: f32[2,8,256], index: 2, kind: output, shape index: {}]
  %s3 = sld [smem:[#allocation0]]
  $region45: #{tpu_custom_call.1} parent=0
    _
  %s5 = ssub.s32 1, %s3
  %s6 = scalar_select 0, %s5, %s3
  $region1: #{tpu_custom_call.1} parent=0
    #allocation3 [shape = 'u8[16384]{0}', space=vmem, size = 0x4000, scoped, tag = 'output window, operand 0']
    #allocation4 [shape = 's32[2]{0}', space=sflag, size = 0x8, scoped, tag = 'scoped memory for tpu_custom_call.1']
    %7 = vsyncpa [#allocation4], 0
    %s8 = scalar_lea.sflag [#allocation4], 1
    %9 = vsyncpa %s8, 0
    loop: start=0, step=1, limit=4
    $region2: #{tpu_custom_call.1} parent=1 // loop_pre_header
      _
    $region3: #{tpu_custom_call.1} parent=1 // loop_header
      %s11 = sphi 0, %s15
      %p12 = scmp.ge.s32.totalorder %s11, 4
      %s18 = sphi 0, %s30
      %s19 = sphi 0, %s26
      %s20 = sphi 0, %s18
      %s21 = sphi 0, %s19
      %s22 = sphi 0, %s20
      %s23 = sphi 0, %s21
      %s33 = sphi 0, %s35
      %s36 = sphi 0, %s33
      %s37 = sphi 0, %s36
      %s53 = sphi 0, %s37
      %s59 = sphi 0, %s61
      %s62 = sphi 0, %s59
      %s63 = sphi 0, %s62
      %s79 = sphi 0, %s63
      %s87 = sphi 0, %s89
      %s90 = sphi 0, %s87
      %s91 = sphi 0, %s90
      %s107 = sphi 0, %s91
    $region4: #{tpu_custom_call.1} parent=1 // loop_header_branch
      %14 = sbr.rel (%p12) target = $region8
    $region5: #{tpu_custom_call.1} parent=1 // loop_body
      %s16 = ssub.s32 %s11, 1
      %s17 = ssub.s32 %s11, 2
      %s24 = sadd.s32 1, %s19
      %p25 = scmp.ge.s32.totalorder %s24, 1
      %s26 = scalar_select %p25, 0, %s24
      %s27 = sadd.s32 1, %s18
      %s28 = scalar_select %p25, %s27, %s18
      %p29 = scmp.ge.s32.totalorder %s28, 2
      %s30 = scalar_select %p29, 0, %s28
      %s31 = ssub.s32 %s18, %s30
      %p32 = scmp.eq.s32.totalorder %s31, 0
      %s34 = sadd.s32 %s33, 1
      %s35 = scalar_select %p32, %s33, %s34
      %p38 = pneg %p32
      %p39 = scmp.eq.s32.totalorder %s11, 1
      %p40 = por %p38, %p39
      %p41 = scmp.ne.s32.totalorder %s33, %s36
      %p42 = scmp.eq.s32.totalorder %s11, 0
      %p43 = por %p41, %p42
      %p44 = scmp.ne.s32.totalorder %s33, %s36
      %p45 = scmp.eq.s32.totalorder %s16, 1
      %p46 = por %p44, %p45
      %p47 = scmp.ne.s32.totalorder %s36, %s37
      %p48 = scmp.eq.s32.totalorder %s16, 0
      %p49 = por %p47, %p48
      %p50 = scmp.ne.s32.totalorder %s36, %s37
      %p51 = scmp.eq.s32.totalorder %s17, 1
      %p52 = por %p50, %p51
      %p54 = scmp.ne.s32.totalorder %s37, %s53
      %p55 = scmp.eq.s32.totalorder %s17, 0
      %p56 = por %p54, %p55
      %s57 = ssub.s32 %s19, %s26
      %p58 = scmp.eq.s32.totalorder %s57, 0
      %s60 = sadd.s32 %s59, 1
      %s61 = scalar_select %p58, %s59, %s60
      %p64 = pneg %p58
      %p65 = scmp.eq.s32.totalorder %s11, 1
      %p66 = por %p64, %p65
      %p67 = scmp.ne.s32.totalorder %s59, %s62
      %p68 = scmp.eq.s32.totalorder %s11, 0
      %p69 = por %p67, %p68
      %p70 = scmp.ne.s32.totalorder %s59, %s62
      %p71 = scmp.eq.s32.totalorder %s16, 1
      %p72 = por %p70, %p71
      %p73 = scmp.ne.s32.totalorder %s62, %s63
      %p74 = scmp.eq.s32.totalorder %s16, 0
      %p75 = por %p73, %p74
      %p76 = scmp.ne.s32.totalorder %s62, %s63
      %p77 = scmp.eq.s32.totalorder %s17, 1
      %p78 = por %p76, %p77
      %p80 = scmp.ne.s32.totalorder %s63, %s79
      %p81 = scmp.eq.s32.totalorder %s17, 0
      %p82 = por %p80, %p81
      %s83 = ssub.s32 %s18, %s30
      %s84 = ssub.s32 %s19, %s26
      %s85 = sor.u32 %s83, %s84
      %p86 = scmp.eq.s32.totalorder %s85, 0
      %s88 = sadd.s32 %s87, 1
      %s89 = scalar_select %p86, %s87, %s88
      %p92 = pneg %p86
      %p93 = scmp.eq.s32.totalorder %s11, 1
      %p94 = por %p92, %p93
      %p95 = scmp.ne.s32.totalorder %s87, %s90
      %p96 = scmp.eq.s32.totalorder %s11, 0
      %p97 = por %p95, %p96
      %p98 = scmp.ne.s32.totalorder %s87, %s90
      %p99 = scmp.eq.s32.totalorder %s16, 1
      %p100 = por %p98, %p99
      %p101 = scmp.ne.s32.totalorder %s90, %s91
      %p102 = scmp.eq.s32.totalorder %s16, 0
      %p103 = por %p101, %p102
      %p104 = scmp.ne.s32.totalorder %s90, %s91
      %p105 = scmp.eq.s32.totalorder %s17, 1
      %p106 = por %p104, %p105
      %p108 = scmp.ne.s32.totalorder %s91, %s107
      %p109 = scmp.eq.s32.totalorder %s17, 0
      %p110 = por %p108, %p109
      %p111 = scmp.le.s32.totalorder 1, %s11
      %p112 = scmp.lt.s32.totalorder %s11, 3
      %p113 = pnand %p111, %p112
      %p114 = pneg %p113
      // Predicated region
      $region9: #{tpu_custom_call.1} parent=5 // pred_check
        _
      $region10: #{tpu_custom_call.1} parent=5 // pred_check_branch
        %116 = sbr.rel (%p113) target = $region12
      $region11: #{tpu_custom_call.1} parent=5 // pred_region
        %s117 = ssub.s32 %s11, 1
        // Predicated region
        $region13: #{tpu_custom_call.1} parent=11 // pred_check
          %p118 = pneg %p75
        $region14: #{tpu_custom_call.1} parent=11 // pred_check_branch
          %120 = sbr.rel (%p118) target = $region16
        $region15: #{tpu_custom_call.1} parent=11 // pred_region
          %p121 = scmp.lt.s32.totalorder %s21, 0
          %s122 = scalar_select %p121, %s21, 0
          %s123 = smul.addr %s122, 4
          %s124 = scalar_lea.vmem %s1, %s123
        $region16: #{tpu_custom_call.1} parent=11 // pred_fallthru
          _
      $region12: #{tpu_custom_call.1} parent=5 // pred_fallthru
        _
      %p125 = scmp.lt.s32.totalorder %s11, 2
      // Predicated region
      $region17: #{tpu_custom_call.1} parent=5 // pred_check
        %p126 = pneg %p125
      $region18: #{tpu_custom_call.1} parent=5 // pred_check_branch
        %128 = sbr.rel (%p126) target = $region20
      $region19: #{tpu_custom_call.1} parent=5 // pred_region
        // Predicated region
        $region21: #{tpu_custom_call.1} parent=19 // pred_check
          %p129 = pneg %p43
        $region22: #{tpu_custom_call.1} parent=19 // pred_check_branch
          %131 = sbr.rel (%p129) target = $region24
        $region23: #{tpu_custom_call.1} parent=19 // pred_region
          %p132 = scmp.lt.s32.totalorder %s18, 1
          %s133 = scalar_select %p132, %s18, 1
          %s134 = smul.addr %s133, 2
          %s135 = smul.addr %s134, 4
          %s136 = scalar_lea.vmem %s0, %s135
        $region24: #{tpu_custom_call.1} parent=19 // pred_fallthru
          _
      $region20: #{tpu_custom_call.1} parent=5 // pred_fallthru
        _
      %p137 = scmp.le.s32.totalorder 1, %s11
      %p138 = scmp.lt.s32.totalorder %s11, 3
      %p139 = pnand %p137, %p138
      %p140 = pneg %p139
      // Predicated region
      $region25: #{tpu_custom_call.1} parent=5 // pred_check
        _
      $region26: #{tpu_custom_call.1} parent=5 // pred_check_branch
        %142 = sbr.rel (%p139) target = $region28
      $region27: #{tpu_custom_call.1} parent=5 // pred_region
        %s143 = ssub.s32 %s11, 1
        %p144 = scmp.lt.s32.totalorder %s20, 1
        %s145 = scalar_select %p144, %s20, 1
        %s146 = smul.addr %s145, 2
        %s147 = smul.addr %s146, 4
        %s148 = scalar_lea.vmem %s0, %s147
        %p149 = pneg %p49
        %p150 = pneg %p46
        %p151 = scmp.lt.s32.totalorder %s21, 0
        %s152 = scalar_select %p151, %s21, 0
        %s153 = smul.addr %s152, 4
        %s154 = scalar_lea.vmem %s1, %s153
        %p155 = pneg %p75
        %p156 = pneg %p72
        %p157 = pneg %p103
        %p158 = pneg %p100
        %s159 = sand.u32 %s90, 1
        %s160 = scalar_lea.sflag [#allocation4], %s159
        %s161 = sand.u32 %s90, 1
        %s162 = smul.addr %s161, 16
        %s163 = scalar_lea.vmem [#allocation3], %s162
        %p164 = scmp.lt.s32.totalorder %s20, 1
        %s165 = scalar_select %p164, %s20, 1
        %s166 = smul.addr %s165, 2
        %s167 = smul.addr %s166, 4
        %s168 = scalar_lea.vmem %s0, %s167
        %p169 = scmp.lt.s32.totalorder %s21, 0
        %s170 = scalar_select %p169, %s21, 0
        %s171 = smul.addr %s170, 4
        %s172 = scalar_lea.vmem %s1, %s171
        %p176 = scmp.eq.s32.totalorder %s21, 0
        // Predicated region
        $region29: #{tpu_custom_call.1} parent=27 // pred_check
          %p177 = pneg %p176
        $region30: #{tpu_custom_call.1} parent=27 // pred_check_branch
          %179 = sbr.rel (%p177) target = $region32
        $region31: #{tpu_custom_call.1} parent=27 // pred_region
          %180 = vst [vmem:[#allocation2] sm:$0x3] 0
          %vm181 = vcmask 132096
          %182 = vst.msk [vmem:[#allocation2 + $0x6] sm:$0x3] %vm181, 0
          %v183 = vld [vmem:[%s168] sm:$0xff]
          %185 = vst [vmem:[#allocation1] ss:$2 sm:$0xff] %v183
          %v186 = vld.sshfl [vmem:[#allocation1] sm:$0xff pattern:$0x75316420]
          %v187 = vld.sshfl [vmem:[#allocation1 + $0x8] sm:$0xff pattern:$0x75316420]
          %v190 = vpack.c.bf16 %v187, %v186
          %v192 = vrot.slane %v190, 2
          %vm193 = vcmask 1041408
          %v196 = vsel %vm193, %v190, %v192
          %198 = vst [vmem:[#allocation2 + $0x2] sm:$0xf] %v196
        $region32: #{tpu_custom_call.1} parent=27 // pred_fallthru
          _
        %v199 = vld [vmem:[%s172] sm:$0xf]
        %s200 = scalar_lea.vmem %s172, 4
        %v201 = vld [vmem:[%s200] sm:$0xf]
        %s202 = scalar_lea.vmem %s172, 8
        %v203 = vld [vmem:[%s202] sm:$0xf]
        %s204 = scalar_lea.vmem %s172, 12
        %v205 = vld [vmem:[%s204] sm:$0xf]
        %s206 = scalar_lea.vmem %s172, 16
        %v207 = vld [vmem:[%s206] sm:$0xf]
        %s208 = scalar_lea.vmem %s172, 20
        %v209 = vld [vmem:[%s208] sm:$0xf]
        %s210 = scalar_lea.vmem %s172, 24
        %v211 = vld [vmem:[%s210] sm:$0xf]
        %s212 = scalar_lea.vmem %s172, 28
        %v213 = vld [vmem:[%s212] sm:$0xf]
        %s214 = scalar_lea.vmem %s172, 32
        %v215 = vld [vmem:[%s214] sm:$0xf]
        %v216 = vlaneseq
        %v217 = vand.u32 %v216, 127
        %vm218 = vcmp.lt.s32.totalorder %v217, 0
        %v219 = vsub.s32 0, %v217
        %v220 = vsel %vm218, %v219, %v217
        %v221 = vshrl.u32 %v220, 4
        %v222 = vand.u32 %v220, 15
        %v223 = vsub.s32 0, %v222
        %v224 = vsel %vm218, %v223, %v222
        %vm225 = vcmp.ne.s32.totalorder %v224, 0
        %vm226 = vcmp.lt.s32.totalorder %v224, 0
        %vm227 = vmand %vm226, %vm225
        %v228 = vadd.s32 %v224, 16
        %v229 = vsel %vm227, %v228, %v224
        %v230 = vld [vmem:[#allocation2] sm:$0xf]
        %vm231 = vcmp.ge.s32.totalorder %v229, 1
        %v232 = vsel %vm231, 1, 0
        %vm233 = vcmp.eq.s32.totalorder %v232, 1
        %v234 = vsel %vm233, 1, 0
        %v235 = vpack.c.b16 %v234, %v234
        %v236 = vunpack.c.l.b16 %v235
        %v237 = vunpack.c.h.b16 %v235
        %v238 = vunpack.c.l.b16 0
        %v239 = vunpack.c.h.b16 0
        %vm240 = vcmp.ne.s32.totalorder %v236, %v238
        %vm241 = vcmp.ne.s32.totalorder %v237, %v239
        %vm242 = vmpackc.low %vm241, %vm240
        %v243 = vsel %vm242, 65537, 0
        %244 = vrot.lane.b32.xlu0 %v243, 111
        %v245 = vpop.permute.xlu0 %244
        %v246 = vrot.slane %v245, 6
        %vm247 = vcmask 908288
        %v248 = vsel %vm247, %v246, %v245
        %v249 = vunpack.c.l.b16 %v248
        %v250 = vunpack.c.h.b16 %v248
        %v251 = vunpack.c.l.b16 0
        %v252 = vunpack.c.h.b16 0
        %vm253 = vcmp.ne.s32.totalorder %v249, %v251
        %vm254 = vcmp.ne.s32.totalorder %v250, %v252
        %vm255 = vmpackc.low %vm254, %vm253
        %v256 = vsel %vm255, %v230, 0
        %258 = vst [vmem:[#allocation1] ss:$4 sm:$0xff] %v230
        %v259 = vld.sshfl [vmem:[#allocation1] sm:$0xff pattern:$0x73625140]
        %v261 = vld.sshfl [vmem:[#allocation1 + $0x8] sm:$0xff pattern:$0x73625140]
        %263 = vrot.lane.b32.xlu0 %v259, 16
        %v264 = vpop.permute.xlu0 %263
        %265 = vrot.lane.b32.xlu0 %v261, 16
        %v266 = vpop.permute.xlu0 %265
        %vm267 = vcmask 130048
        %v268 = vsel %vm267, %v264, %v266
        %vm269 = vcmask 31744
        %v271 = vsel %vm269, %v201, 0
        %vm273 = vcmask 1041408
        %v275 = vsel %vm273, %v268, 0
        %277 = vmatpush.bf16.msra.mxu0 0
        %278 = vmatpush.bf16.msra.mxu0 0
        %279 = vmatpush.bf16.msra.mxu0 0
        %280 = vmatpush.bf16.msra.mxu0 0
        %281 = vmatpush.bf16.msra.mxu0 0
        %282 = vmatpush.bf16.msra.mxu0 0
        %283 = vmatpush.bf16.msra.mxu0 0
        %284 = vmatpush.bf16.msra.mxu0 %v275
        %285 = vmatmul.bf16.gmra.mxu0 %v271
        %v286 = vpop.f32.mrf.mxu0
        %v287 = vadd.f32 0.0, %v286
        %v288 = vpop.f32.mrf.mxu0
        %289 = vdwg.mxu0
        %291 = vst [vmem:[#allocation1] ss:$4 sm:$0xff] %v256
        %v292 = vld.sshfl [vmem:[#allocation1] sm:$0xff pattern:$0x73625140]
        %v294 = vld.sshfl [vmem:[#allocation1 + $0x8] sm:$0xff pattern:$0x73625140]
        %296 = vrot.lane.b32.xlu0 %v292, 17
        %v297 = vpop.permute.xlu0 %296
        %298 = vrot.lane.b32.xlu0 %v294, 17
        %v299 = vpop.permute.xlu0 %298
        %vm300 = vcmask 138240
        %v301 = vsel %vm300, %v297, %v299
        %v303 = vsel %vm269, %v199, 0
        %v306 = vsel %vm273, %v301, 0
        %308 = vmatpush.bf16.msra.mxu0 0
        %309 = vmatpush.bf16.msra.mxu0 0
        %310 = vmatpush.bf16.msra.mxu0 0
        %311 = vmatpush.bf16.msra.mxu0 0
        %312 = vmatpush.bf16.msra.mxu0 0
        %313 = vmatpush.bf16.msra.mxu0 0
        %314 = vmatpush.bf16.msra.mxu0 0
        %315 = vmatpush.bf16.msra.mxu0 %v306
        %316 = vmatmul.bf16.gmra.mxu0 %v303
        %v317 = vpop.f32.mrf.mxu0
        %v318 = vadd.f32 %v287, %v317
        %v319 = vpop.f32.mrf.mxu0
        %320 = vdwg.mxu0
        %v321 = vld [vmem:[#allocation2] sm:$0xf]
        %vm322 = vcmp.lt.s32.totalorder %v229, 15
        %v323 = vsel %vm322, 1, 0
        %vm324 = vcmp.eq.s32.totalorder %v323, 1
        %v325 = vsel %vm324, 1, 0
        %v326 = vpack.c.b16 %v325, %v325
        %v327 = vunpack.c.l.b16 %v326
        %v328 = vunpack.c.h.b16 %v326
        %v329 = vunpack.c.l.b16 0
        %v330 = vunpack.c.h.b16 0
        %vm331 = vcmp.ne.s32.totalorder %v327, %v329
        %vm332 = vcmp.ne.s32.totalorder %v328, %v330
        %vm333 = vmpackc.low %vm332, %vm331
        %v334 = vsel %vm333, 65537, 0
        %335 = vrot.lane.b32.xlu0 %v334, 113
        %v336 = vpop.permute.xlu0 %335
        %v337 = vrot.slane %v336, 6
        %vm338 = vcmask 924672
        %v339 = vsel %vm338, %v337, %v336
        %v340 = vunpack.c.l.b16 %v339
        %v341 = vunpack.c.h.b16 %v339
        %v342 = vunpack.c.l.b16 0
        %v343 = vunpack.c.h.b16 0
        %vm344 = vcmp.ne.s32.totalorder %v340, %v342
        %vm345 = vcmp.ne.s32.totalorder %v341, %v343
        %vm346 = vmpackc.low %vm345, %vm344
        %v347 = vsel %vm346, %v321, 0
        %349 = vst [vmem:[#allocation1] ss:$4 sm:$0xff] %v347
        %v350 = vld.sshfl [vmem:[#allocation1] sm:$0xff pattern:$0x73625140]
        %v352 = vld.sshfl [vmem:[#allocation1 + $0x8] sm:$0xff pattern:$0x73625140]
        %354 = vrot.lane.b32.xlu0 %v350, 15
        %v355 = vpop.permute.xlu0 %354
        %356 = vrot.lane.b32.xlu0 %v352, 15
        %v357 = vpop.permute.xlu0 %356
        %vm358 = vcmask 121856
        %v359 = vsel %vm358, %v355, %v357
        %v361 = vsel %vm269, %v203, 0
        %v364 = vsel %vm273, %v359, 0
        %366 = vmatpush.bf16.msra.mxu0 0
        %367 = vmatpush.bf16.msra.mxu0 0
        %368 = vmatpush.bf16.msra.mxu0 0
        %369 = vmatpush.bf16.msra.mxu0 0
        %370 = vmatpush.bf16.msra.mxu0 0
        %371 = vmatpush.bf16.msra.mxu0 0
        %372 = vmatpush.bf16.msra.mxu0 0
        %373 = vmatpush.bf16.msra.mxu0 %v364
        %374 = vmatmul.bf16.gmra.mxu0 %v361
        %v375 = vpop.f32.mrf.mxu0
        %v376 = vadd.f32 0.0, %v375
        %v377 = vpop.f32.mrf.mxu0
        %378 = vdwg.mxu0
        %v379 = vadd.f32 %v318, %v376
        %v380 = vld [vmem:[#allocation2] sm:$0xf]
        %381 = vrot.lane.b32.xlu0 %v243, 127
        %v382 = vpop.permute.xlu0 %381
        %v383 = vrot.slane %v382, 6
        %vm384 = vcmask 1039360
        %v385 = vsel %vm384, %v383, %v382
        %v386 = vunpack.c.l.b16 %v385
        %v387 = vunpack.c.h.b16 %v385
        %v388 = vunpack.c.l.b16 0
        %v389 = vunpack.c.h.b16 0
        %vm390 = vcmp.ne.s32.totalorder %v386, %v388
        %vm391 = vcmp.ne.s32.totalorder %v387, %v389
        %vm392 = vmpackc.low %vm391, %vm390
        %v393 = vsel %vm392, %v380, 0
        %395 = vst [vmem:[#allocation1] ss:$4 sm:$0xff] %v393
        %v396 = vld.sshfl [vmem:[#allocation1] sm:$0xff pattern:$0x73625140]
        %v398 = vld.sshfl [vmem:[#allocation1 + $0x8] sm:$0xff pattern:$0x73625140]
        %400 = vrot.lane.b32.xlu0 %v396, 1
        %v401 = vpop.permute.xlu0 %400
        %402 = vrot.lane.b32.xlu0 %v398, 1
        %v403 = vpop.permute.xlu0 %402
        %vm404 = vcmask 7168
        %v405 = vsel %vm404, %v401, %v403
        %v407 = vsel %vm269, %v205, 0
        %v410 = vsel %vm273, %v405, 0
        %412 = vmatpush.bf16.msra.mxu0 0
        %413 = vmatpush.bf16.msra.mxu0 0
        %414 = vmatpush.bf16.msra.mxu0 0
        %415 = vmatpush.bf16.msra.mxu0 0
        %416 = vmatpush.bf16.msra.mxu0 0
        %417 = vmatpush.bf16.msra.mxu0 0
        %418 = vmatpush.bf16.msra.mxu0 0
        %419 = vmatpush.bf16.msra.mxu0 %v410
        %420 = vmatmul.bf16.gmra.mxu0 %v407
        %v421 = vpop.f32.mrf.mxu0
        %v422 = vadd.f32 0.0, %v421
        %v423 = vpop.f32.mrf.mxu0
        %424 = vdwg.mxu0
        %v425 = vadd.f32 %v379, %v422
        %v426 = vld [vmem:[#allocation2 + $0x2] sm:$0x3]
        %v428 = vsel %vm269, %v207, 0
        %v431 = vsel %vm273, %v426, 0
        %433 = vmatpush.bf16.msra.mxu0 0
        %434 = vmatpush.bf16.msra.mxu0 0
        %435 = vmatpush.bf16.msra.mxu0 0
        %436 = vmatpush.bf16.msra.mxu0 0
        %437 = vmatpush.bf16.msra.mxu0 0
        %438 = vmatpush.bf16.msra.mxu0 0
        %439 = vmatpush.bf16.msra.mxu0 0
        %440 = vmatpush.bf16.msra.mxu0 %v431
        %441 = vmatmul.bf16.gmra.mxu0 %v428
        %v442 = vpop.f32.mrf.mxu0
        %v443 = vadd.f32 0.0, %v442
        %v444 = vpop.f32.mrf.mxu0
        %445 = vdwg.mxu0
        %v446 = vadd.f32 %v425, %v443
        %v447 = vld [vmem:[#allocation2 + $0x2] sm:$0xf]
        %448 = vrot.lane.b32.xlu0 %v334, 1
        %v449 = vpop.permute.xlu0 %448
        %v450 = vrot.slane %v449, 6
        %v451 = vsel %vm404, %v450, %v449
        %v452 = vunpack.c.l.b16 %v451
        %v453 = vunpack.c.h.b16 %v451
        %v454 = vunpack.c.l.b16 0
        %v455 = vunpack.c.h.b16 0
        %vm456 = vcmp.ne.s32.totalorder %v452, %v454
        %vm457 = vcmp.ne.s32.totalorder %v453, %v455
        %vm458 = vmpackc.low %vm457, %vm456
        %v459 = vsel %vm458, %v447, 0
        %461 = vst [vmem:[#allocation1] ss:$4 sm:$0xff] %v459
        %v462 = vld.sshfl [vmem:[#allocation1] sm:$0xff pattern:$0x73625140]
        %v464 = vld.sshfl [vmem:[#allocation1 + $0x8] sm:$0xff pattern:$0x73625140]
        %466 = vrot.lane.b32.xlu0 %v462, 127
        %v467 = vpop.permute.xlu0 %466
        %468 = vrot.lane.b32.xlu0 %v464, 127
        %v469 = vpop.permute.xlu0 %468
        %v470 = vsel %vm384, %v467, %v469
        %v472 = vsel %vm269, %v209, 0
        %v475 = vsel %vm273, %v470, 0
        %477 = vmatpush.bf16.msra.mxu0 0
        %478 = vmatpush.bf16.msra.mxu0 0
        %479 = vmatpush.bf16.msra.mxu0 0
        %480 = vmatpush.bf16.msra.mxu0 0
        %481 = vmatpush.bf16.msra.mxu0 0
        %482 = vmatpush.bf16.msra.mxu0 0
        %483 = vmatpush.bf16.msra.mxu0 0
        %484 = vmatpush.bf16.msra.mxu0 %v475
        %485 = vmatmul.bf16.gmra.mxu0 %v472
        %v486 = vpop.f32.mrf.mxu0
        %v487 = vadd.f32 0.0, %v486
        %v488 = vpop.f32.mrf.mxu0
        %489 = vdwg.mxu0
        %v490 = vadd.f32 %v446, %v487
        %v491 = vld [vmem:[#allocation2 + $0x2] sm:$0xf]
        %492 = vrot.lane.b32.xlu0 %v243, 15
        %v493 = vpop.permute.xlu0 %492
        %v494 = vrot.slane %v493, 6
        %v495 = vsel %vm358, %v494, %v493
        %v496 = vunpack.c.l.b16 %v495
        %v497 = vunpack.c.h.b16 %v495
        %v498 = vunpack.c.l.b16 0
        %v499 = vunpack.c.h.b16 0
        %vm500 = vcmp.ne.s32.totalorder %v496, %v498
        %vm501 = vcmp.ne.s32.totalorder %v497, %v499
        %vm502 = vmpackc.low %vm501, %vm500
        %v503 = vsel %vm502, %v491, 0
        %505 = vst [vmem:[#allocation1] ss:$4 sm:$0xff] %v503
        %v506 = vld.sshfl [vmem:[#allocation1] sm:$0xff pattern:$0x73625140]
        %v508 = vld.sshfl [vmem:[#allocation1 + $0x8] sm:$0xff pattern:$0x73625140]
        %510 = vrot.lane.b32.xlu0 %v506, 113
        %v511 = vpop.permute.xlu0 %510
        %512 = vrot.lane.b32.xlu0 %v508, 113
        %v513 = vpop.permute.xlu0 %512
        %v514 = vsel %vm338, %v511, %v513
        %v516 = vsel %vm269, %v211, 0
        %v519 = vsel %vm273, %v514, 0
        %521 = vmatpush.bf16.msra.mxu0 0
        %522 = vmatpush.bf16.msra.mxu0 0
        %523 = vmatpush.bf16.msra.mxu0 0
        %524 = vmatpush.bf16.msra.mxu0 0
        %525 = vmatpush.bf16.msra.mxu0 0
        %526 = vmatpush.bf16.msra.mxu0 0
        %527 = vmatpush.bf16.msra.mxu0 0
        %528 = vmatpush.bf16.msra.mxu0 %v519
        %529 = vmatmul.bf16.gmra.mxu0 %v516
        %v530 = vpop.f32.mrf.mxu0
        %v531 = vadd.f32 0.0, %v530
        %v532 = vpop.f32.mrf.mxu0
        %533 = vdwg.mxu0
        %v534 = vadd.f32 %v490, %v531
        %v535 = vld [vmem:[#allocation2 + $0x2] sm:$0xf]
        %537 = vst [vmem:[#allocation1] ss:$4 sm:$0xff] %v535
        %v538 = vld.sshfl [vmem:[#allocation1] sm:$0xff pattern:$0x73625140]
        %v540 = vld.sshfl [vmem:[#allocation1 + $0x8] sm:$0xff pattern:$0x73625140]
        %542 = vrot.lane.b32.xlu0 %v538, 112
        %v543 = vpop.permute.xlu0 %542
        %544 = vrot.lane.b32.xlu0 %v540, 112
        %v545 = vpop.permute.xlu0 %544
        %vm546 = vcmask 916480
        %v547 = vsel %vm546, %v543, %v545
        %v549 = vsel %vm269, %v213, 0
        %v552 = vsel %vm273, %v547, 0
        %554 = vmatpush.bf16.msra.mxu0 0
        %555 = vmatpush.bf16.msra.mxu0 0
        %556 = vmatpush.bf16.msra.mxu0 0
        %557 = vmatpush.bf16.msra.mxu0 0
        %558 = vmatpush.bf16.msra.mxu0 0
        %559 = vmatpush.bf16.msra.mxu0 0
        %560 = vmatpush.bf16.msra.mxu0 0
        %561 = vmatpush.bf16.msra.mxu0 %v552
        %562 = vmatmul.bf16.gmra.mxu0 %v549
        %v563 = vpop.f32.mrf.mxu0
        %v564 = vadd.f32 0.0, %v563
        %v565 = vpop.f32.mrf.mxu0
        %566 = vdwg.mxu0
        %v567 = vadd.f32 %v534, %v564
        %v568 = vld [vmem:[#allocation2 + $0x2] sm:$0xf]
        %569 = vrot.lane.b32.xlu0 %v334, 17
        %v570 = vpop.permute.xlu0 %569
        %v571 = vrot.slane %v570, 6
        %v572 = vsel %vm300, %v571, %v570
        %v573 = vunpack.c.l.b16 %v572
        %v574 = vunpack.c.h.b16 %v572
        %v575 = vunpack.c.l.b16 0
        %v576 = vunpack.c.h.b16 0
        %vm577 = vcmp.ne.s32.totalorder %v573, %v575
        %vm578 = vcmp.ne.s32.totalorder %v574, %v576
        %vm579 = vmpackc.low %vm578, %vm577
        %v580 = vsel %vm579, %v568, 0
        %582 = vst [vmem:[#allocation1] ss:$4 sm:$0xff] %v580
        %v583 = vld.sshfl [vmem:[#allocation1] sm:$0xff pattern:$0x73625140]
        %v585 = vld.sshfl [vmem:[#allocation1 + $0x8] sm:$0xff pattern:$0x73625140]
        %587 = vrot.lane.b32.xlu0 %v583, 111
        %v588 = vpop.permute.xlu0 %587
        %589 = vrot.lane.b32.xlu0 %v585, 111
        %v590 = vpop.permute.xlu0 %589
        %v591 = vsel %vm247, %v588, %v590
        %v593 = vsel %vm269, %v215, 0
        %v596 = vsel %vm273, %v591, 0
        %598 = vmatpush.bf16.msra.mxu0 0
        %599 = vmatpush.bf16.msra.mxu0 0
        %600 = vmatpush.bf16.msra.mxu0 0
        %601 = vmatpush.bf16.msra.mxu0 0
        %602 = vmatpush.bf16.msra.mxu0 0
        %603 = vmatpush.bf16.msra.mxu0 0
        %604 = vmatpush.bf16.msra.mxu0 0
        %605 = vmatpush.bf16.msra.mxu0 %v596
        %606 = vmatmul.bf16.gmra.mxu0 %v593
        %v607 = vpop.f32.mrf.mxu0
        %v608 = vadd.f32 0.0, %v607
        %v609 = vpop.f32.mrf.mxu0
        %610 = vdwg.mxu0
        %v611 = vadd.f32 %v567, %v608
        %v612 = vmax.f32 %v611, 0.0
        %613 = vst [vmem:[%s163] sm:$0xff] %v612
        %v614 = vadd.s32 %v217, 128
        %vm615 = vcmp.lt.s32.totalorder %v614, 0
        %v616 = vsub.s32 0, %v614
        %v617 = vsel %vm615, %v616, %v614
        %v618 = vshrl.u32 %v617, 4
        %v619 = vand.u32 %v617, 15
        %v620 = vsub.s32 0, %v619
        %v621 = vsel %vm615, %v620, %v619
        %vm622 = vcmp.ne.s32.totalorder %v621, 0
        %vm623 = vcmp.lt.s32.totalorder %v621, 0
        %vm624 = vmand %vm623, %vm622
        %v625 = vadd.s32 %v621, 16
        %v626 = vsel %vm624, %v625, %v621
        %v627 = vld [vmem:[#allocation2 + $0x2] sm:$0xf]
        %vm628 = vcmp.ge.s32.totalorder %v626, 1
        %v629 = vsel %vm628, 1, 0
        %vm630 = vcmp.eq.s32.totalorder %v629, 1
        %v631 = vsel %vm630, 1, 0
        %v632 = vpack.c.b16 %v631, %v631
        %v633 = vunpack.c.l.b16 %v632
        %v634 = vunpack.c.h.b16 %v632
        %v635 = vunpack.c.l.b16 0
        %v636 = vunpack.c.h.b16 0
        %vm637 = vcmp.ne.s32.totalorder %v633, %v635
        %vm638 = vcmp.ne.s32.totalorder %v634, %v636
        %vm639 = vmpackc.low %vm638, %vm637
        %v640 = vsel %vm639, 65537, 0
        %641 = vrot.lane.b32.xlu0 %v640, 111
        %v642 = vpop.permute.xlu0 %641
        %v643 = vrot.slane %v642, 6
        %v644 = vsel %vm247, %v643, %v642
        %v645 = vunpack.c.l.b16 %v644
        %v646 = vunpack.c.h.b16 %v644
        %v647 = vunpack.c.l.b16 0
        %v648 = vunpack.c.h.b16 0
        %vm649 = vcmp.ne.s32.totalorder %v645, %v647
        %vm650 = vcmp.ne.s32.totalorder %v646, %v648
        %vm651 = vmpackc.low %vm650, %vm649
        %v652 = vsel %vm651, %v627, 0
        %654 = vst [vmem:[#allocation1] ss:$4 sm:$0xff] %v627
        %v655 = vld.sshfl [vmem:[#allocation1] sm:$0xff pattern:$0x73625140]
        %v657 = vld.sshfl [vmem:[#allocation1 + $0x8] sm:$0xff pattern:$0x73625140]
        %659 = vrot.lane.b32.xlu0 %v655, 16
        %v660 = vpop.permute.xlu0 %659
        %661 = vrot.lane.b32.xlu0 %v657, 16
        %v662 = vpop.permute.xlu0 %661
        %v663 = vsel %vm267, %v660, %v662
        %v665 = vsel %vm273, %v663, 0
        %667 = vmatpush.bf16.msra.mxu0 0
        %668 = vmatpush.bf16.msra.mxu0 0
        %669 = vmatpush.bf16.msra.mxu0 0
        %670 = vmatpush.bf16.msra.mxu0 0
        %671 = vmatpush.bf16.msra.mxu0 0
        %672 = vmatpush.bf16.msra.mxu0 0
        %673 = vmatpush.bf16.msra.mxu0 0
        %674 = vmatpush.bf16.msra.mxu0 %v665
        %675 = vmatmul.bf16.gmra.mxu0 %v271
        %v676 = vpop.f32.mrf.mxu0
        %v677 = vadd.f32 0.0, %v676
        %v678 = vpop.f32.mrf.mxu0
        %679 = vdwg.mxu0
        %681 = vst [vmem:[#allocation1] ss:$4 sm:$0xff] %v652
        %v682 = vld.sshfl [vmem:[#allocation1] sm:$0xff pattern:$0x73625140]
        %v684 = vld.sshfl [vmem:[#allocation1 + $0x8] sm:$0xff pattern:$0x73625140]
        %686 = vrot.lane.b32.xlu0 %v682, 17
        %v687 = vpop.permute.xlu0 %686
        %688 = vrot.lane.b32.xlu0 %v684, 17
        %v689 = vpop.permute.xlu0 %688
        %v690 = vsel %vm300, %v687, %v689
        %v692 = vsel %vm273, %v690, 0
        %694 = vmatpush.bf16.msra.mxu0 0
        %695 = vmatpush.bf16.msra.mxu0 0
        %696 = vmatpush.bf16.msra.mxu0 0
        %697 = vmatpush.bf16.msra.mxu0 0
        %698 = vmatpush.bf16.msra.mxu0 0
        %699 = vmatpush.bf16.msra.mxu0 0
        %700 = vmatpush.bf16.msra.mxu0 0
        %701 = vmatpush.bf16.msra.mxu0 %v692
        %702 = vmatmul.bf16.gmra.mxu0 %v303
        %v703 = vpop.f32.mrf.mxu0
        %v704 = vadd.f32 %v677, %v703
        %v705 = vpop.f32.mrf.mxu0
        %706 = vdwg.mxu0
        %v707 = vld [vmem:[#allocation2 + $0x2] sm:$0xf]
        %vm708 = vcmp.lt.s32.totalorder %v626, 15
        %v709 = vsel %vm708, 1, 0
        %vm710 = vcmp.eq.s32.totalorder %v709, 1
        %v711 = vsel %vm710, 1, 0
        %v712 = vpack.c.b16 %v711, %v711
        %v713 = vunpack.c.l.b16 %v712
        %v714 = vunpack.c.h.b16 %v712
        %v715 = vunpack.c.l.b16 0
        %v716 = vunpack.c.h.b16 0
        %vm717 = vcmp.ne.s32.totalorder %v713, %v715
        %vm718 = vcmp.ne.s32.totalorder %v714, %v716
        %vm719 = vmpackc.low %vm718, %vm717
        %v720 = vsel %vm719, 65537, 0
        %721 = vrot.lane.b32.xlu0 %v720, 113
        %v722 = vpop.permute.xlu0 %721
        %v723 = vrot.slane %v722, 6
        %v724 = vsel %vm338, %v723, %v722
        %v725 = vunpack.c.l.b16 %v724
        %v726 = vunpack.c.h.b16 %v724
        %v727 = vunpack.c.l.b16 0
        %v728 = vunpack.c.h.b16 0
        %vm729 = vcmp.ne.s32.totalorder %v725, %v727
        %vm730 = vcmp.ne.s32.totalorder %v726, %v728
        %vm731 = vmpackc.low %vm730, %vm729
        %v732 = vsel %vm731, %v707, 0
        %734 = vst [vmem:[#allocation1] ss:$4 sm:$0xff] %v732
        %v735 = vld.sshfl [vmem:[#allocation1] sm:$0xff pattern:$0x73625140]
        %v737 = vld.sshfl [vmem:[#allocation1 + $0x8] sm:$0xff pattern:$0x73625140]
        %739 = vrot.lane.b32.xlu0 %v735, 15
        %v740 = vpop.permute.xlu0 %739
        %741 = vrot.lane.b32.xlu0 %v737, 15
        %v742 = vpop.permute.xlu0 %741
        %v743 = vsel %vm358, %v740, %v742
        %v745 = vsel %vm273, %v743, 0
        %747 = vmatpush.bf16.msra.mxu0 0
        %748 = vmatpush.bf16.msra.mxu0 0
        %749 = vmatpush.bf16.msra.mxu0 0
        %750 = vmatpush.bf16.msra.mxu0 0
        %751 = vmatpush.bf16.msra.mxu0 0
        %752 = vmatpush.bf16.msra.mxu0 0
        %753 = vmatpush.bf16.msra.mxu0 0
        %754 = vmatpush.bf16.msra.mxu0 %v745
        %755 = vmatmul.bf16.gmra.mxu0 %v361
        %v756 = vpop.f32.mrf.mxu0
        %v757 = vadd.f32 0.0, %v756
        %v758 = vpop.f32.mrf.mxu0
        %759 = vdwg.mxu0
        %v760 = vadd.f32 %v704, %v757
        %v761 = vld [vmem:[#allocation2 + $0x2] sm:$0xf]
        %762 = vrot.lane.b32.xlu0 %v640, 127
        %v763 = vpop.permute.xlu0 %762
        %v764 = vrot.slane %v763, 6
        %v765 = vsel %vm384, %v764, %v763
        %v766 = vunpack.c.l.b16 %v765
        %v767 = vunpack.c.h.b16 %v765
        %v768 = vunpack.c.l.b16 0
        %v769 = vunpack.c.h.b16 0
        %vm770 = vcmp.ne.s32.totalorder %v766, %v768
        %vm771 = vcmp.ne.s32.totalorder %v767, %v769
        %vm772 = vmpackc.low %vm771, %vm770
        %v773 = vsel %vm772, %v761, 0
        %775 = vst [vmem:[#allocation1] ss:$4 sm:$0xff] %v773
        %v776 = vld.sshfl [vmem:[#allocation1] sm:$0xff pattern:$0x73625140]
        %v778 = vld.sshfl [vmem:[#allocation1 + $0x8] sm:$0xff pattern:$0x73625140]
        %780 = vrot.lane.b32.xlu0 %v776, 1
        %v781 = vpop.permute.xlu0 %780
        %782 = vrot.lane.b32.xlu0 %v778, 1
        %v783 = vpop.permute.xlu0 %782
        %v784 = vsel %vm404, %v781, %v783
        %v786 = vsel %vm273, %v784, 0
        %788 = vmatpush.bf16.msra.mxu0 0
        %789 = vmatpush.bf16.msra.mxu0 0
        %790 = vmatpush.bf16.msra.mxu0 0
        %791 = vmatpush.bf16.msra.mxu0 0
        %792 = vmatpush.bf16.msra.mxu0 0
        %793 = vmatpush.bf16.msra.mxu0 0
        %794 = vmatpush.bf16.msra.mxu0 0
        %795 = vmatpush.bf16.msra.mxu0 %v786
        %796 = vmatmul.bf16.gmra.mxu0 %v407
        %v797 = vpop.f32.mrf.mxu0
        %v798 = vadd.f32 0.0, %v797
        %v799 = vpop.f32.mrf.mxu0
        %800 = vdwg.mxu0
        %v801 = vadd.f32 %v760, %v798
        %v802 = vld [vmem:[#allocation2 + $0x4] sm:$0x3]
        %v804 = vsel %vm273, %v802, 0
        %806 = vmatpush.bf16.msra.mxu0 0
        %807 = vmatpush.bf16.msra.mxu0 0
        %808 = vmatpush.bf16.msra.mxu0 0
        %809 = vmatpush.bf16.msra.mxu0 0
        %810 = vmatpush.bf16.msra.mxu0 0
        %811 = vmatpush.bf16.msra.mxu0 0
        %812 = vmatpush.bf16.msra.mxu0 0
        %813 = vmatpush.bf16.msra.mxu0 %v804
        %814 = vmatmul.bf16.gmra.mxu0 %v428
        %v815 = vpop.f32.mrf.mxu0
        %v816 = vadd.f32 0.0, %v815
        %v817 = vpop.f32.mrf.mxu0
        %818 = vdwg.mxu0
        %v819 = vadd.f32 %v801, %v816
        %v820 = vld [vmem:[#allocation2 + $0x4] sm:$0xf]
        %821 = vrot.lane.b32.xlu0 %v720, 1
        %v822 = vpop.permute.xlu0 %821
        %v823 = vrot.slane %v822, 6
        %v824 = vsel %vm404, %v823, %v822
        %v825 = vunpack.c.l.b16 %v824
        %v826 = vunpack.c.h.b16 %v824
        %v827 = vunpack.c.l.b16 0
        %v828 = vunpack.c.h.b16 0
        %vm829 = vcmp.ne.s32.totalorder %v825, %v827
        %vm830 = vcmp.ne.s32.totalorder %v826, %v828
        %vm831 = vmpackc.low %vm830, %vm829
        %v832 = vsel %vm831, %v820, 0
        %834 = vst [vmem:[#allocation1] ss:$4 sm:$0xff] %v832
        %v835 = vld.sshfl [vmem:[#allocation1] sm:$0xff pattern:$0x73625140]
        %v837 = vld.sshfl [vmem:[#allocation1 + $0x8] sm:$0xff pattern:$0x73625140]
        %839 = vrot.lane.b32.xlu0 %v835, 127
        %v840 = vpop.permute.xlu0 %839
        %841 = vrot.lane.b32.xlu0 %v837, 127
        %v842 = vpop.permute.xlu0 %841
        %v843 = vsel %vm384, %v840, %v842
        %v845 = vsel %vm273, %v843, 0
        %847 = vmatpush.bf16.msra.mxu0 0
        %848 = vmatpush.bf16.msra.mxu0 0
        %849 = vmatpush.bf16.msra.mxu0 0
        %850 = vmatpush.bf16.msra.mxu0 0
        %851 = vmatpush.bf16.msra.mxu0 0
        %852 = vmatpush.bf16.msra.mxu0 0
        %853 = vmatpush.bf16.msra.mxu0 0
        %854 = vmatpush.bf16.msra.mxu0 %v845
        %855 = vmatmul.bf16.gmra.mxu0 %v472
        %v856 = vpop.f32.mrf.mxu0
        %v857 = vadd.f32 0.0, %v856
        %v858 = vpop.f32.mrf.mxu0
        %859 = vdwg.mxu0
        %v860 = vadd.f32 %v819, %v857
        %v861 = vld [vmem:[#allocation2 + $0x4] sm:$0xf]
        %862 = vrot.lane.b32.xlu0 %v640, 15
        %v863 = vpop.permute.xlu0 %862
        %v864 = vrot.slane %v863, 6
        %v865 = vsel %vm358, %v864, %v863
        %v866 = vunpack.c.l.b16 %v865
        %v867 = vunpack.c.h.b16 %v865
        %v868 = vunpack.c.l.b16 0
        %v869 = vunpack.c.h.b16 0
        %vm870 = vcmp.ne.s32.totalorder %v866, %v868
        %vm871 = vcmp.ne.s32.totalorder %v867, %v869
        %vm872 = vmpackc.low %vm871, %vm870
        %v873 = vsel %vm872, %v861, 0
        %875 = vst [vmem:[#allocation1] ss:$4 sm:$0xff] %v873
        %v876 = vld.sshfl [vmem:[#allocation1] sm:$0xff pattern:$0x73625140]
        %v878 = vld.sshfl [vmem:[#allocation1 + $0x8] sm:$0xff pattern:$0x73625140]
        %880 = vrot.lane.b32.xlu0 %v876, 113
        %v881 = vpop.permute.xlu0 %880
        %882 = vrot.lane.b32.xlu0 %v878, 113
        %v883 = vpop.permute.xlu0 %882
        %v884 = vsel %vm338, %v881, %v883
        %v886 = vsel %vm273, %v884, 0
        %888 = vmatpush.bf16.msra.mxu0 0
        %889 = vmatpush.bf16.msra.mxu0 0
        %890 = vmatpush.bf16.msra.mxu0 0
        %891 = vmatpush.bf16.msra.mxu0 0
        %892 = vmatpush.bf16.msra.mxu0 0
        %893 = vmatpush.bf16.msra.mxu0 0
        %894 = vmatpush.bf16.msra.mxu0 0
        %895 = vmatpush.bf16.msra.mxu0 %v886
        %896 = vmatmul.bf16.gmra.mxu0 %v516
        %v897 = vpop.f32.mrf.mxu0
        %v898 = vadd.f32 0.0, %v897
        %v899 = vpop.f32.mrf.mxu0
        %900 = vdwg.mxu0
        %v901 = vadd.f32 %v860, %v898
        %v902 = vld [vmem:[#allocation2 + $0x4] sm:$0xf]
        %904 = vst [vmem:[#allocation1] ss:$4 sm:$0xff] %v902
        %v905 = vld.sshfl [vmem:[#allocation1] sm:$0xff pattern:$0x73625140]
        %v907 = vld.sshfl [vmem:[#allocation1 + $0x8] sm:$0xff pattern:$0x73625140]
        %909 = vrot.lane.b32.xlu0 %v905, 112
        %v910 = vpop.permute.xlu0 %909
        %911 = vrot.lane.b32.xlu0 %v907, 112
        %v912 = vpop.permute.xlu0 %911
        %v913 = vsel %vm546, %v910, %v912
        %v915 = vsel %vm273, %v913, 0
        %917 = vmatpush.bf16.msra.mxu0 0
        %918 = vmatpush.bf16.msra.mxu0 0
        %919 = vmatpush.bf16.msra.mxu0 0
        %920 = vmatpush.bf16.msra.mxu0 0
        %921 = vmatpush.bf16.msra.mxu0 0
        %922 = vmatpush.bf16.msra.mxu0 0
        %923 = vmatpush.bf16.msra.mxu0 0
        %924 = vmatpush.bf16.msra.mxu0 %v915
        %925 = vmatmul.bf16.gmra.mxu0 %v549
        %v926 = vpop.f32.mrf.mxu0
        %v927 = vadd.f32 0.0, %v926
        %v928 = vpop.f32.mrf.mxu0
        %929 = vdwg.mxu0
        %v930 = vadd.f32 %v901, %v927
        %v931 = vld [vmem:[#allocation2 + $0x4] sm:$0xf]
        %932 = vrot.lane.b32.xlu0 %v720, 17
        %v933 = vpop.permute.xlu0 %932
        %v934 = vrot.slane %v933, 6
        %v935 = vsel %vm300, %v934, %v933
        %v936 = vunpack.c.l.b16 %v935
        %v937 = vunpack.c.h.b16 %v935
        %v938 = vunpack.c.l.b16 0
        %v939 = vunpack.c.h.b16 0
        %vm940 = vcmp.ne.s32.totalorder %v936, %v938
        %vm941 = vcmp.ne.s32.totalorder %v937, %v939
        %vm942 = vmpackc.low %vm941, %vm940
        %v943 = vsel %vm942, %v931, 0
        %945 = vst [vmem:[#allocation1] ss:$4 sm:$0xff] %v943
        %v946 = vld.sshfl [vmem:[#allocation1] sm:$0xff pattern:$0x73625140]
        %v948 = vld.sshfl [vmem:[#allocation1 + $0x8] sm:$0xff pattern:$0x73625140]
        %950 = vrot.lane.b32.xlu0 %v946, 111
        %v951 = vpop.permute.xlu0 %950
        %952 = vrot.lane.b32.xlu0 %v948, 111
        %v953 = vpop.permute.xlu0 %952
        %v954 = vsel %vm247, %v951, %v953
        %v956 = vsel %vm273, %v954, 0
        %958 = vmatpush.bf16.msra.mxu0 0
        %959 = vmatpush.bf16.msra.mxu0 0
        %960 = vmatpush.bf16.msra.mxu0 0
        %961 = vmatpush.bf16.msra.mxu0 0
        %962 = vmatpush.bf16.msra.mxu0 0
        %963 = vmatpush.bf16.msra.mxu0 0
        %964 = vmatpush.bf16.msra.mxu0 0
        %965 = vmatpush.bf16.msra.mxu0 %v956
        %966 = vmatmul.bf16.gmra.mxu0 %v593
        %v967 = vpop.f32.mrf.mxu0
        %v968 = vadd.f32 0.0, %v967
        %v969 = vpop.f32.mrf.mxu0
        %970 = vdwg.mxu0
        %v971 = vadd.f32 %v930, %v968
        %v972 = vmax.f32 %v971, 0.0
        %973 = vst [vmem:[%s163 + $0x8] sm:$0xff] %v972
        %s974 = sand.u32 %s90, 1
        %s975 = scalar_lea.sflag [#allocation4], %s974
        %s976 = sand.u32 %s90, 1
        %s977 = smul.addr %s976, 16
        %s978 = scalar_lea.vmem [#allocation3], %s977
        // Predicated region
        $region33: #{tpu_custom_call.1} parent=27 // pred_check
          %p979 = pneg %p100
        $region34: #{tpu_custom_call.1} parent=27 // pred_check_branch
          %981 = sbr.rel (%p979) target = $region36
        $region35: #{tpu_custom_call.1} parent=27 // pred_region
          %983 = vsyncadd %s975, 0
          %s984 = smul.addr %s21, 2
          %s985 = smul.addr %s20, 2
          %s986 = sadd.s32 %s984, %s985
          %s987 = smul.addr %s986, 8
          %s988 = scalar_lea.hbm %s2, %s987
          %s990 = sshll.u32 %s978, 4
          %s991 = int_to_ptr.vmem [resolvable:$true] %s990
          %s992 = sshll.u32 %s988, 4
          %s993 = int_to_ptr.hbm [resolvable:$true] %s992
          %995 = dma.vmem_to_hbm [thread:$0]  %s991, 256, %s993, %s975
        $region36: #{tpu_custom_call.1} parent=27 // pred_fallthru
          _
      $region28: #{tpu_custom_call.1} parent=5 // pred_fallthru
        _
      %p996 = scmp.le.s32.totalorder 2, %s11
      // Predicated region
      $region37: #{tpu_custom_call.1} parent=5 // pred_check
        %p997 = pneg %p996
      $region38: #{tpu_custom_call.1} parent=5 // pred_check_branch
        %999 = sbr.rel (%p997) target = $region40
      $region39: #{tpu_custom_call.1} parent=5 // pred_region
        %s1000 = ssub.s32 %s11, 2
        // Predicated region
        $region41: #{tpu_custom_call.1} parent=39 // pred_check
          %p1001 = pneg %p106
        $region42: #{tpu_custom_call.1} parent=39 // pred_check_branch
          %1003 = sbr.rel (%p1001) target = $region44
        $region43: #{tpu_custom_call.1} parent=39 // pred_region
          %s1004 = sand.u32 %s91, 1
          %s1005 = scalar_lea.sflag [#allocation4], %s1004
          %s1006 = sand.u32 %s91, 1
          %s1007 = smul.addr %s1006, 16
          %s1008 = scalar_lea.vmem [#allocation3], %s1007
          %1010 = dma.done %s1005, 256
        $region44: #{tpu_custom_call.1} parent=39 // pred_fallthru
          _
      $region40: #{tpu_custom_call.1} parent=5 // pred_fallthru
        _
    $region6: #{tpu_custom_call.1} parent=1 // loop_footer
      %s15 = sadd.s32 1, %s11
    $region7: #{tpu_custom_call.1} parent=1 // loop_footer_branch
      %10 = sbr.rel target = $region3
    $region8: #{tpu_custom_call.1} parent=1 // loop_exit
      _
    %1011 = vsyncpa [#allocation4], 1
    %s1012 = scalar_lea.sflag [#allocation4], 1
    %1013 = vsyncpa %s1012, 1

</llo_original>
